<compile_context>
chip_gen: v7x
topology: tpu7x:2x2x1
jax: 0.10.0
libtpu: 0.0.40
codegen_flags: <defaults>
</compile_context>

<pallas_src>
import math

import jax
import jax.numpy as jnp
from jax.experimental import pallas as pl
from jax.experimental.pallas import tpu as pltpu

_LANE = 128
_SUBLANE = 8
_MIB = 1024 * 1024


def _round_up(n: int, m: int) -> int:
    return ((n + m - 1) // m) * m


def _chip_config():
    """Per-generation tile budget / thresholds (all sizes in bytes)."""
    kind = ""
    try:
        kind = jax.devices()[0].device_kind.lower()
    except Exception:  # pragma: no cover - defensive; fall through to defaults
        pass
    if "v7" in kind:
        # 2 TC/chip, ~3.2 TB/s HBM, 64 MiB VMEM: big tiles to amortize the
        # ~0.35 us per-step overhead, low single-program threshold + >=2 grid
        # steps so megacore shards the stream across both cores.
        return dict(tile_budget=8 * _MIB, single_max=512 * 1024,
                    vmem_limit=48 * _MIB, prefer_multi_step=True)
    if "v6" in kind:
        # ~1.4 TB/s HBM, 128 MiB VMEM: 4 x 6 MiB double-buffered is cheap.
        return dict(tile_budget=6 * _MIB, single_max=6 * _MIB,
                    vmem_limit=48 * _MIB, prefer_multi_step=False)
    if "v5" in kind:
        # Conservative: 4 x 2 MiB stays well under the 16 MiB scoped-VMEM
        # default; HBM is slow enough that bigger tiles buy little.
        return dict(tile_budget=2 * _MIB, single_max=2 * _MIB,
                    vmem_limit=None, prefer_multi_step=False)
    # Unknown generation: conservative defaults that are safe everywhere.
    return dict(tile_budget=2 * _MIB, single_max=2 * _MIB,
                vmem_limit=None, prefer_multi_step=False)


def _add_one_kernel(x_ref, o_ref):
    # Elementwise hot path: whole VMEM block at once (VPU).
    o_ref[...] = x_ref[...] + jnp.asarray(1, dtype=o_ref.dtype)


def _add_one_slab(x2d: jax.Array, cfg) -> jax.Array:
    """Run x2d + 1 on a lane-dense (rows, lane) slab (lane % 128 == 0)."""
    rows, lane = x2d.shape
    dtype = x2d.dtype
    itemsize = jnp.dtype(dtype).itemsize
    slab_bytes = rows * lane * itemsize

    if slab_bytes <= cfg["single_max"]:
        # Small input: single program, whole slab resident in VMEM — no grid,
        # no pipeline prologue/epilogue.
        return pl.pallas_call(
            _add_one_kernel,
            out_shape=jax.ShapeDtypeStruct((rows, lane), dtype),
            in_specs=[pl.BlockSpec(memory_space=pltpu.MemorySpace.VMEM)],
            out_specs=pl.BlockSpec(memory_space=pltpu.MemorySpace.VMEM),
        )(x2d)

    # Streaming path: tile rows with big lane-dense tiles sized purely by the
    # per-chip byte budget (sublane-rounded). The ragged last block (rows not a
    # multiple of tile_rows) is masked by Pallas — no padding, no slicing.
    max_tile_rows = max(
        _SUBLANE, (cfg["tile_budget"] // (lane * itemsize)) // _SUBLANE * _SUBLANE
    )
    tile_rows = min(max_tile_rows, _round_up(rows, _SUBLANE))
    if cfg["prefer_multi_step"] and pl.cdiv(rows, tile_rows) < 2:
        # v7x megacore: guarantee at least 2 parallel grid steps.
        tile_rows = max(_SUBLANE, _round_up(pl.cdiv(rows, 2), _SUBLANE))

    compiler_kwargs = dict(dimension_semantics=("parallel",))
    if cfg["vmem_limit"] is not None:
        compiler_kwargs["vmem_limit_bytes"] = cfg["vmem_limit"]

    return pl.pallas_call(
        _add_one_kernel,
        out_shape=jax.ShapeDtypeStruct((rows, lane), dtype),
        grid=(pl.cdiv(rows, tile_rows),),
        in_specs=[pl.BlockSpec((tile_rows, lane), lambda i: (i, 0))],
        out_specs=pl.BlockSpec((tile_rows, lane), lambda i: (i, 0)),
        compiler_params=pltpu.CompilerParams(**compiler_kwargs),
    )(x2d)


def add_one(x: jax.Array) -> jax.Array:
    """Pallas implementation of Model.forward: output = input + 1."""
    orig_shape = x.shape
    dtype = x.dtype
    total = int(math.prod(orig_shape)) if orig_shape else 1

    # Degenerate / tiny inputs (including empty arrays and 0-d scalars): a
    # kernel launch is pure overhead, let XLA do the add directly.
    if total < _LANE:
        return x + jnp.asarray(1, dtype=dtype)

    cfg = _chip_config()
    flat = x.reshape(-1)

    main = (total // _LANE) * _LANE   # lane-aligned bulk
    tail = total - main               # < 128 ragged elements (usually 0)

    # Pick the widest lane width that keeps the sublane dimension packed
    # (rows >= 8) so stores are wide and unmasked.
    lane = _LANE
    for cand in (1024, 512, 256):
        if main % cand == 0 and (main // cand) >= _SUBLANE:
            lane = cand
            break
    rows = main // lane

    src = flat if tail == 0 else flat[:main]
    main_out = _add_one_slab(src.reshape(rows, lane), cfg).reshape(-1)

    if tail:
        # Tiny (<128-element) ragged tail handled with a jnp epilogue instead
        # of padding / re-copying the whole array.
        tail_out = flat[main:] + jnp.asarray(1, dtype=dtype)
        return jnp.concatenate([main_out, tail_out]).reshape(orig_shape)
    return main_out.reshape(orig_shape)


if __name__ == "__main__":
    key = jax.random.PRNGKey(0)
    # Small NCHW shape consistent with the PyTorch module's typical input.
    x = jax.random.normal(key, (2, 4, 16, 16), dtype=jnp.float32)

    y = add_one(x)
    y = jax.block_until_ready(y)

    # Correctness check against the reference semantics (x + 1).
    expected = x + 1.0
    assert y.shape == x.shape and y.dtype == x.dtype
    assert jnp.allclose(y, expected), "mismatch vs reference x + 1"

    print("KERNEL_OK")
</pallas_src>

<mosaic_0001>
module attributes {stable_mosaic.version = 11 : i64} {
  func.func @_add_one_kernel(%arg0: memref<8x256xf32, #tpu.memory_space<vmem>>, %arg1: memref<8x256xf32, #tpu.memory_space<vmem>>) attributes {dimension_semantics = [], scalar_prefetch = 0 : i64, scratch_operands = 0 : i64, tpu.core_type = #tpu.core_type<tc>} {
    %c0 = arith.constant 0 : index
    %c0_0 = arith.constant 0 : index
    %0 = vector.load %arg0[%c0, %c0_0] : memref<8x256xf32, #tpu.memory_space<vmem>>, vector<8x256xf32>
    %cst = arith.constant 1.000000e+00 : f32
    %1 = vector.broadcast %cst : f32 to vector<8x256xf32>
    %2 = arith.addf %0, %1 : vector<8x256xf32>
    %c0_1 = arith.constant 0 : index
    %c0_2 = arith.constant 0 : index
    %3 = vector.load %arg1[%c0_1, %c0_2] : memref<8x256xf32, #tpu.memory_space<vmem>>, vector<8x256xf32>
    tpu.vector_store %arg1[%c0_1, %c0_2], %2 {strides = array<i32>} : memref<8x256xf32, #tpu.memory_space<vmem>>, vector<8x256xf32>,
    return
  }
}

</mosaic_0001>

<llo_original>
// kernel: tpu_custom_call.1
$region0: #{tpu_custom_call.1}
  #allocation0 [shape = 'u32[]', space=smem, size = 0x4, offset = 0x4, fixed_abs, tag = 'smem constant byte address 0x4 - core index']
  #allocation1 [shape = 'u32[144,128]{1,0:T(1,128)}', space=vmem, size = 0x12000, scoped, tag = 'internal scratch']
  %s0 = inlined_call_operand.hbm [shape: f32[8,256], index: 0, kind: input, shape index: {}]
  %s1 = inlined_call_operand.hbm [shape: f32[8,256], index: 1, kind: output, shape index: {}]
  %s2 = sld [smem:[#allocation0]]
  $region18: #{tpu_custom_call.1} parent=0
    _
  %s4 = ssub.s32 1, %s2
  %s5 = scalar_select 0, %s4, %s2
  $region1: #{tpu_custom_call.1} parent=0
    #allocation2 [shape = 'u8[8192]{0}', space=vmem, size = 0x2000, scoped, tag = 'input window, operand 0, single buffered']
    #allocation3 [shape = 's32[1]{0}', space=sflag, size = 0x4, scoped, tag = 'scoped memory for tpu_custom_call.1']
    #allocation4 [shape = 's32[1]{0}', space=sflag, size = 0x4, scoped, tag = 'scoped memory for tpu_custom_call.1']
    #allocation5 [shape = 'u8[8192]{0}', space=vmem, size = 0x2000, scoped, tag = 'output window, operand 0, single buffered']
    %6 = vsyncpa [#allocation3], 0
    %7 = vsyncpa [#allocation4], 0
    // Predicated region
    $region2: #{tpu_custom_call.1} parent=1 // pred_check
      _
    $region3: #{tpu_custom_call.1} parent=1 // pred_check_branch
      %9 = sbr.rel (0) target = $region5
    $region4: #{tpu_custom_call.1} parent=1 // pred_region
      %s11 = ssub.s32 256, 256
      %12 = vsyncadd [#allocation3], %s11
      %s14 = sshll.u32 [#allocation2], 4
      %s15 = int_to_ptr.vmem [resolvable:$true] %s14
      %17 = dma.hbm_to_vmem [thread:$0]  %s0, 256, %s15, [#allocation3]
    $region5: #{tpu_custom_call.1} parent=1 // pred_fallthru
      _
    // Predicated region
    $region6: #{tpu_custom_call.1} parent=1 // pred_check
      _
    $region7: #{tpu_custom_call.1} parent=1 // pred_check_branch
      %19 = sbr.rel (0) target = $region9
    $region8: #{tpu_custom_call.1} parent=1 // pred_region
      %20 = dma.done [#allocation3], 256
    $region9: #{tpu_custom_call.1} parent=1 // pred_fallthru
      _
    %v21 = vld [vmem:[#allocation2] sm:$0xff]
    %v22 = vld [vmem:[#allocation2 + $0x8] sm:$0xff]
    %v23 = vadd.f32 %v21, 1.0
    %v24 = vadd.f32 %v22, 1.0
    %25 = vst [vmem:[#allocation5] sm:$0xff] %v23
    %26 = vst [vmem:[#allocation5 + $0x8] sm:$0xff] %v24
    // Predicated region
    $region10: #{tpu_custom_call.1} parent=1 // pred_check
      _
    $region11: #{tpu_custom_call.1} parent=1 // pred_check_branch
      %28 = sbr.rel (0) target = $region13
    $region12: #{tpu_custom_call.1} parent=1 // pred_region
      %s30 = ssub.s32 256, 256
      %31 = vsyncadd [#allocation4], %s30
      %s33 = sshll.u32 [#allocation5], 4
      %s34 = int_to_ptr.vmem [resolvable:$true] %s33
      %36 = dma.vmem_to_hbm [thread:$0]  %s34, 256, %s1, [#allocation4]
    $region13: #{tpu_custom_call.1} parent=1 // pred_fallthru
      _
    // Predicated region
    $region14: #{tpu_custom_call.1} parent=1 // pred_check
      _
    $region15: #{tpu_custom_call.1} parent=1 // pred_check_branch
      %38 = sbr.rel (0) target = $region17
    $region16: #{tpu_custom_call.1} parent=1 // pred_region
      %39 = dma.done [#allocation4], 256
    $region17: #{tpu_custom_call.1} parent=1 // pred_fallthru
      _
    %40 = vsyncpa [#allocation3], 1
    %41 = vsyncpa [#allocation4], 1

</llo_original>
